<compile_context>
chip_gen: v6e
topology: v6e:2x2x1
jax: 0.10.0
libtpu: 0.0.40
codegen_flags: <defaults>
</compile_context>

<pallas_src>
import functools

import jax
import jax.numpy as jnp
from jax import lax
from jax.experimental import pallas as pl
from jax.experimental.pallas import tpu as pltpu

_LANES = 128
_ACC_ROWS = 8
_CHUNK_ROWS = 512                       # rows folded into the accumulator per inner step
_BLOCK_BYTES_BUDGET = 4 * 1024 * 1024   # HBM bytes per input per pipeline buffer
_LOG_CLAMP = -100.0                     # PyTorch BCELoss clamps log terms at -100
_NUM_CORES = 2                          # leading grid axis: 2 TCs on v7x, harmless elsewhere


def _bce_kernel(x_ref, y_ref, o_ref, acc_ref, *, rows_total, block_rows,
                chunk_rows, steps_per_core, num_full_blocks, need_mask,
                binary_targets):
    i = pl.program_id(1)
    n_chunks = block_rows // chunk_rows

    @pl.when(i == 0)
    def _():
        acc_ref[...] = jnp.zeros_like(acc_ref)

    def loss_from(x, y):
        x = x.astype(jnp.float32)
        y = y.astype(jnp.float32)
        if binary_targets:
            # Hard {0,1} targets: single log, fewer VPU/EUP ops (v7x compute-bound regime).
            p_true = jnp.where(y >= 0.5, x, 1.0 - x)
            return -jnp.maximum(jnp.log(p_true), _LOG_CLAMP)
        log_x = jnp.maximum(jnp.log(x), _LOG_CLAMP)
        log_1mx = jnp.maximum(jnp.log(1.0 - x), _LOG_CLAMP)
        return -(y * log_x + (1.0 - y) * log_1mx)

    def fold(loss):
        # (chunk_rows, 128) -> (chunk_rows/8, 8, 128) -> VPU adds into the vreg accumulator.
        acc_ref[...] += loss.reshape(-1, _ACC_ROWS, _LANES).sum(axis=0)

    def chunk_start(c):
        if isinstance(c, int):
            return c * chunk_rows
        return pl.multiple_of(c * chunk_rows, chunk_rows)

    def fast_chunk(c):
        s = chunk_start(c)
        fold(loss_from(x_ref[pl.ds(s, chunk_rows), :],
                       y_ref[pl.ds(s, chunk_rows), :]))

    def run(chunk_fn):
        if n_chunks == 1:
            chunk_fn(0)
        else:
            pl.loop(0, n_chunks)(chunk_fn)

    if not need_mask:
        # Whole grid consists of full, non-duplicated blocks: no mask work at all.
        run(fast_chunk)
    else:
        block_idx = pl.program_id(0) * steps_per_core + i

        @pl.when(block_idx < num_full_blocks)
        def _():
            run(fast_chunk)

        @pl.when(block_idx >= num_full_blocks)
        def _():
            # Partial tail block or clamped/duplicated block: force out-of-range rows to
            # (x=1, y=1) *before* the logs -> their loss is exactly 0 (no NaN/Inf reliance).
            def masked_chunk(c):
                s = chunk_start(c)
                row = lax.broadcasted_iota(jnp.int32, (chunk_rows, _LANES), 0)
                global_row = block_idx * block_rows + s + row
                valid = global_row < rows_total
                x = jnp.where(valid, x_ref[pl.ds(s, chunk_rows), :].astype(jnp.float32), 1.0)
                y = jnp.where(valid, y_ref[pl.ds(s, chunk_rows), :].astype(jnp.float32), 1.0)
                fold(loss_from(x, y))

            run(masked_chunk)

    @pl.when(i == pl.num_programs(1) - 1)
    def _():
        # Lane-dense per-core partial sums; the cross-lane reduce happens in the wrapper.
        o_ref[...] = acc_ref[...]


def binary_cross_entropy_loss(inp, target, *, binary_targets=False):
    """Mean BCE over flattened inputs, matching torch.nn.BCELoss(reduction='mean')."""
    x = inp.reshape(-1)
    y = target.reshape(-1)
    n = x.shape[0]

    # Pad (only if necessary) to a whole number of (8, 128) vregs.  Padded elements use
    # (x=1, y=1) -> exactly zero loss; for typical NCHW tensors this is a no-op.
    vreg = _ACC_ROWS * _LANES
    n_pad = ((n + vreg - 1) // vreg) * vreg
    if n_pad != n:
        pad = n_pad - n
        x = jnp.concatenate([x, jnp.ones((pad,), x.dtype)])
        y = jnp.concatenate([y, jnp.ones((pad,), y.dtype)])

    rows = n_pad // _LANES                      # multiple of 8
    x2 = x.reshape(rows, _LANES)
    y2 = y.reshape(rows, _LANES)

    # Block size: largest multiple of the chunk size that fits the per-buffer byte budget
    # (8192 rows for f32, 16384 for bf16).  Small inputs use a single full-dim block.
    itemsize = max(jnp.dtype(x2.dtype).itemsize, jnp.dtype(y2.dtype).itemsize)
    cap = (_BLOCK_BYTES_BUDGET // (_LANES * itemsize)) // _CHUNK_ROWS * _CHUNK_ROWS
    cap = max(cap, _CHUNK_ROWS)
    if rows <= _CHUNK_ROWS:
        block_rows = rows
        chunk_rows = rows
    else:
        block_rows = min(cap, (rows // _CHUNK_ROWS) * _CHUNK_ROWS)
        chunk_rows = _CHUNK_ROWS

    num_tiles = pl.cdiv(rows, block_rows)
    steps_per_core = pl.cdiv(num_tiles, _NUM_CORES)
    num_full_blocks = rows // block_rows
    need_mask = (rows % block_rows != 0) or (_NUM_CORES * steps_per_core != num_tiles)

    kernel = functools.partial(
        _bce_kernel,
        rows_total=rows,
        block_rows=block_rows,
        chunk_rows=chunk_rows,
        steps_per_core=steps_per_core,
        num_full_blocks=num_full_blocks,
        need_mask=need_mask,
        binary_targets=binary_targets,
    )

    def in_map(p, i):
        # Clamp so a core assigned fewer tiles never addresses a block starting past the
        # array; the masked path zeroes the duplicated data.
        return (jnp.minimum(p * steps_per_core + i, num_tiles - 1), 0)

    # 2 inputs x 2 pipeline buffers x block + chunk-sized intermediates/accumulator slack.
    in_block_bytes = block_rows * _LANES * itemsize
    vmem_limit = int(min(max(4 * in_block_bytes + 8 * 1024 * 1024,
                             32 * 1024 * 1024),
                         48 * 1024 * 1024))

    partials = pl.pallas_call(
        kernel,
        out_shape=jax.ShapeDtypeStruct((_NUM_CORES * _ACC_ROWS, _LANES), jnp.float32),
        grid_spec=pltpu.PrefetchScalarGridSpec(
            num_scalar_prefetch=0,
            grid=(_NUM_CORES, steps_per_core),
            in_specs=[
                pl.BlockSpec((block_rows, _LANES), in_map),
                pl.BlockSpec((block_rows, _LANES), in_map),
            ],
            out_specs=pl.BlockSpec((_ACC_ROWS, _LANES), lambda p, i: (p, 0)),
            scratch_shapes=[pltpu.VMEM((_ACC_ROWS, _LANES), jnp.float32)],
        ),
        compiler_params=pltpu.CompilerParams(
            dimension_semantics=("parallel", "arbitrary"),
            vmem_limit_bytes=vmem_limit,
        ),
    )(x2, y2)

    # reduction='mean' over the true (unpadded) element count.
    return jnp.sum(partials) / jnp.float32(n)


if __name__ == "__main__":
    key = jax.random.PRNGKey(0)
    k1, k2, k3, k4 = jax.random.split(key, 4)

    def ref_bce(xa, ya):
        xf = xa.reshape(-1).astype(jnp.float32)
        yf = ya.reshape(-1).astype(jnp.float32)
        return jnp.mean(-(yf * jnp.maximum(jnp.log(xf), _LOG_CLAMP)
                          + (1.0 - yf) * jnp.maximum(jnp.log(1.0 - xf), _LOG_CLAMP)))

    # NCHW-shaped inputs, consistent with a typical segmentation-style use.
    shape = (2, 4, 16, 16)
    inp = jax.nn.sigmoid(jax.random.normal(k1, shape, dtype=jnp.float32))
    target = (jax.random.uniform(k2, shape) > 0.5).astype(jnp.float32)

    loss = binary_cross_entropy_loss(inp, target)
    jax.block_until_ready(loss)
    ref = ref_bce(inp, target)
    assert jnp.allclose(loss, ref, rtol=1e-5, atol=1e-6), (loss, ref)

    # Non-vreg-aligned element count with soft targets: exercises padding + masked tail.
    shape2 = (3, 5, 7)
    inp2 = jax.nn.sigmoid(jax.random.normal(k3, shape2, dtype=jnp.float32))
    target2 = jax.random.uniform(k4, shape2, dtype=jnp.float32)
    loss2 = binary_cross_entropy_loss(inp2, target2)
    jax.block_until_ready(loss2)
    ref2 = ref_bce(inp2, target2)
    assert jnp.allclose(loss2, ref2, rtol=1e-5, atol=1e-6), (loss2, ref2)

    print("KERNEL_OK")
</pallas_src>

<mosaic_0001>
module attributes {stable_mosaic.version = 11 : i64} {
  func.func @_bce_kernel(%arg0: i32, %arg1: i32, %arg2: memref<16x128xf32, #tpu.memory_space<vmem>>, %arg3: memref<16x128xf32, #tpu.memory_space<vmem>>, %arg4: memref<8x128xf32, #tpu.memory_space<vmem>>, %arg5: memref<8x128xf32, #tpu.memory_space<vmem>>) attributes {dimension_semantics = [#tpu.dimension_semantics<parallel>, #tpu.dimension_semantics<arbitrary>], iteration_bounds = array<i64: 2, 1>, scalar_prefetch = 0 : i64, scratch_operands = 1 : i64, tpu.core_type = #tpu.core_type<tc>, window_params = [{transform_indices = @transform_0, window_bounds = array<i64: 16, 128>}, {transform_indices = @transform_1, window_bounds = array<i64: 16, 128>}, {transform_indices = @transform_2, window_bounds = array<i64: 8, 128>}]} {
    %c0_i32 = arith.constant 0 : i32
    %0 = arith.cmpi eq, %arg1, %c0_i32 : i32
    %1 = arith.extui %0 : i1 to i32
    %c0_i32_0 = arith.constant 0 : i32
    %2 = arith.cmpi ne, %1, %c0_i32_0 : i32
    scf.if %2 {
      %cst = arith.constant 0.000000e+00 : f32
      %14 = vector.broadcast %cst : f32 to vector<8x128xf32>
      %c0 = arith.constant 0 : index
      %c0_7 = arith.constant 0 : index
      %15 = vector.load %arg5[%c0, %c0_7] : memref<8x128xf32, #tpu.memory_space<vmem>>, vector<8x128xf32>
      tpu.vector_store %arg5[%c0, %c0_7], %14 {strides = array<i32>} : memref<8x128xf32, #tpu.memory_space<vmem>>, vector<8x128xf32>,
    } else {
    }
    %c1_i32 = arith.constant 1 : i32
    %3 = arith.muli %arg0, %c1_i32 : i32
    %4 = arith.addi %3, %arg1 : i32
    %c1_i32_1 = arith.constant 1 : i32
    %5 = arith.cmpi slt, %4, %c1_i32_1 : i32
    %6 = arith.extui %5 : i1 to i32
    %c0_i32_2 = arith.constant 0 : i32
    %7 = arith.cmpi ne, %6, %c0_i32_2 : i32
    scf.if %7 {
      %c0 = arith.constant 0 : index
      %c0_7 = arith.constant 0 : index
      %14 = vector.load %arg2[%c0, %c0_7] : memref<16x128xf32, #tpu.memory_space<vmem>>, vector<16x128xf32>
      %c0_8 = arith.constant 0 : index
      %c0_9 = arith.constant 0 : index
      %15 = vector.load %arg3[%c0_8, %c0_9] : memref<16x128xf32, #tpu.memory_space<vmem>>, vector<16x128xf32>
      %16 = math.log %14 : vector<16x128xf32>
      %cst = arith.constant -1.000000e+02 : f32
      %17 = vector.broadcast %cst : f32 to vector<16x128xf32>
      %18 = arith.maximumf %16, %17 : vector<16x128xf32>
      %cst_10 = arith.constant 1.000000e+00 : f32
      %19 = vector.broadcast %cst_10 : f32 to vector<16x128xf32>
      %20 = arith.subf %19, %14 : vector<16x128xf32>
      %21 = math.log %20 : vector<16x128xf32>
      %cst_11 = arith.constant -1.000000e+02 : f32
      %22 = vector.broadcast %cst_11 : f32 to vector<16x128xf32>
      %23 = arith.maximumf %21, %22 : vector<16x128xf32>
      %24 = arith.mulf %15, %18 : vector<16x128xf32>
      %cst_12 = arith.constant 1.000000e+00 : f32
      %25 = vector.broadcast %cst_12 : f32 to vector<16x128xf32>
      %26 = arith.subf %25, %15 : vector<16x128xf32>
      %27 = arith.mulf %26, %23 : vector<16x128xf32>
      %28 = arith.addf %24, %27 : vector<16x128xf32>
      %cst_13 = arith.constant 0.000000e+00 : f32
      %29 = vector.broadcast %cst_13 : f32 to vector<16x128xf32>
      %30 = arith.subf %29, %28 : vector<16x128xf32>
      %c0_14 = arith.constant 0 : index
      %c0_15 = arith.constant 0 : index
      %31 = vector.load %arg5[%c0_14, %c0_15] : memref<8x128xf32, #tpu.memory_space<vmem>>, vector<8x128xf32>
      %32 = vector.shape_cast %30 : vector<16x128xf32> to vector<2x8x128xf32>
      %cst_16 = arith.constant dense<0.000000e+00> : vector<8x128xf32>
      %33 = vector.multi_reduction <add>, %32, %cst_16 [0] : vector<2x8x128xf32> to vector<8x128xf32>
      %34 = arith.addf %31, %33 : vector<8x128xf32>
      %c0_17 = arith.constant 0 : index
      %c0_18 = arith.constant 0 : index
      %35 = vector.load %arg5[%c0_17, %c0_18] : memref<8x128xf32, #tpu.memory_space<vmem>>, vector<8x128xf32>
      tpu.vector_store %arg5[%c0_17, %c0_18], %34 {strides = array<i32>} : memref<8x128xf32, #tpu.memory_space<vmem>>, vector<8x128xf32>,
    } else {
    }
    %c1_i32_3 = arith.constant 1 : i32
    %8 = arith.cmpi sge, %4, %c1_i32_3 : i32
    %9 = arith.extui %8 : i1 to i32
    %c0_i32_4 = arith.constant 0 : i32
    %10 = arith.cmpi ne, %9, %c0_i32_4 : i32
    scf.if %10 {
      %14 = tpu.iota {dimensions = array<i32: 0>} : vector<16x128xi32>
      %c16_i32 = arith.constant 16 : i32
      %15 = arith.muli %4, %c16_i32 : i32
      %c0_i32_7 = arith.constant 0 : i32
      %16 = arith.addi %15, %c0_i32_7 : i32
      %17 = vector.broadcast %16 : i32 to vector<16x128xi32>
      %18 = arith.addi %17, %14 : vector<16x128xi32>
      %c16_i32_8 = arith.constant 16 : i32
      %19 = vector.broadcast %c16_i32_8 : i32 to vector<16x128xi32>
      %20 = arith.cmpi slt, %18, %19 : vector<16x128xi32>
      %c0 = arith.constant 0 : index
      %c0_9 = arith.constant 0 : index
      %21 = vector.load %arg2[%c0, %c0_9] : memref<16x128xf32, #tpu.memory_space<vmem>>, vector<16x128xf32>
      %cst = arith.constant 1.000000e+00 : f32
      %22 = vector.broadcast %cst : f32 to vector<16x128xf32>
      %23 = arith.select %20, %21, %22 : vector<16x128xi1>, vector<16x128xf32>
      %c0_10 = arith.constant 0 : index
      %c0_11 = arith.constant 0 : index
      %24 = vector.load %arg3[%c0_10, %c0_11] : memref<16x128xf32, #tpu.memory_space<vmem>>, vector<16x128xf32>
      %cst_12 = arith.constant 1.000000e+00 : f32
      %25 = vector.broadcast %cst_12 : f32 to vector<16x128xf32>
      %26 = arith.select %20, %24, %25 : vector<16x128xi1>, vector<16x128xf32>
      %27 = math.log %23 : vector<16x128xf32>
      %cst_13 = arith.constant -1.000000e+02 : f32
      %28 = vector.broadcast %cst_13 : f32 to vector<16x128xf32>
      %29 = arith.maximumf %27, %28 : vector<16x128xf32>
      %cst_14 = arith.constant 1.000000e+00 : f32
      %30 = vector.broadcast %cst_14 : f32 to vector<16x128xf32>
      %31 = arith.subf %30, %23 : vector<16x128xf32>
      %32 = math.log %31 : vector<16x128xf32>
      %cst_15 = arith.constant -1.000000e+02 : f32
      %33 = vector.broadcast %cst_15 : f32 to vector<16x128xf32>
      %34 = arith.maximumf %32, %33 : vector<16x128xf32>
      %35 = arith.mulf %26, %29 : vector<16x128xf32>
      %cst_16 = arith.constant 1.000000e+00 : f32
      %36 = vector.broadcast %cst_16 : f32 to vector<16x128xf32>
      %37 = arith.subf %36, %26 : vector<16x128xf32>
      %38 = arith.mulf %37, %34 : vector<16x128xf32>
      %39 = arith.addf %35, %38 : vector<16x128xf32>
      %cst_17 = arith.constant 0.000000e+00 : f32
      %40 = vector.broadcast %cst_17 : f32 to vector<16x128xf32>
      %41 = arith.subf %40, %39 : vector<16x128xf32>
      %c0_18 = arith.constant 0 : index
      %c0_19 = arith.constant 0 : index
      %42 = vector.load %arg5[%c0_18, %c0_19] : memref<8x128xf32, #tpu.memory_space<vmem>>, vector<8x128xf32>
      %43 = vector.shape_cast %41 : vector<16x128xf32> to vector<2x8x128xf32>
      %cst_20 = arith.constant dense<0.000000e+00> : vector<8x128xf32>
      %44 = vector.multi_reduction <add>, %43, %cst_20 [0] : vector<2x8x128xf32> to vector<8x128xf32>
      %45 = arith.addf %42, %44 : vector<8x128xf32>
      %c0_21 = arith.constant 0 : index
      %c0_22 = arith.constant 0 : index
      %46 = vector.load %arg5[%c0_21, %c0_22] : memref<8x128xf32, #tpu.memory_space<vmem>>, vector<8x128xf32>
      tpu.vector_store %arg5[%c0_21, %c0_22], %45 {strides = array<i32>} : memref<8x128xf32, #tpu.memory_space<vmem>>, vector<8x128xf32>,
    } else {
    }
    %c0_i32_5 = arith.constant 0 : i32
    %11 = arith.cmpi eq, %arg1, %c0_i32_5 : i32
    %12 = arith.extui %11 : i1 to i32
    %c0_i32_6 = arith.constant 0 : i32
    %13 = arith.cmpi ne, %12, %c0_i32_6 : i32
    scf.if %13 {
      %c0 = arith.constant 0 : index
      %c0_7 = arith.constant 0 : index
      %14 = vector.load %arg5[%c0, %c0_7] : memref<8x128xf32, #tpu.memory_space<vmem>>, vector<8x128xf32>
      %c0_8 = arith.constant 0 : index
      %c0_9 = arith.constant 0 : index
      %15 = vector.load %arg4[%c0_8, %c0_9] : memref<8x128xf32, #tpu.memory_space<vmem>>, vector<8x128xf32>
      tpu.vector_store %arg4[%c0_8, %c0_9], %14 {strides = array<i32>} : memref<8x128xf32, #tpu.memory_space<vmem>>, vector<8x128xf32>,
    } else {
    }
    return
  }
  func.func @transform_0(%arg0: i32, %arg1: i32) -> (i32, i32) {
    %c1_i32 = arith.constant 1 : i32
    %0 = arith.muli %arg0, %c1_i32 : i32
    %1 = arith.addi %0, %arg1 : i32
    %c0_i32 = arith.constant 0 : i32
    %2 = arith.minsi %1, %c0_i32 : i32
    %c0_i32_0 = arith.constant 0 : i32
    %c0_i32_1 = arith.constant 0 : i32
    return %2, %c0_i32_0 : i32, i32
  }
  func.func @transform_1(%arg0: i32, %arg1: i32) -> (i32, i32) {
    %c1_i32 = arith.constant 1 : i32
    %0 = arith.muli %arg0, %c1_i32 : i32
    %1 = arith.addi %0, %arg1 : i32
    %c0_i32 = arith.constant 0 : i32
    %2 = arith.minsi %1, %c0_i32 : i32
    %c0_i32_0 = arith.constant 0 : i32
    %c0_i32_1 = arith.constant 0 : i32
    return %2, %c0_i32_0 : i32, i32
  }
  func.func @transform_2(%arg0: i32, %arg1: i32) -> (i32, i32) {
    %c0_i32 = arith.constant 0 : i32
    %c0_i32_0 = arith.constant 0 : i32
    return %arg0, %c0_i32 : i32, i32
  }
}

</mosaic_0001>

<llo_original>
// kernel: tpu_custom_call.1
$region0: #{tpu_custom_call.1}
  #allocation0 [shape = 'u32[]', space=smem, size = 0x4, offset = 0x4, fixed_abs, tag = 'smem constant byte address 0x4 - core index']
  #allocation1 [shape = 'u32[144,128]{1,0:T(1,128)}', space=vmem, size = 0x12000, scoped, tag = 'internal scratch']
  #allocation2 [shape = 'f32[8,128]{1,0:T(8,128)}', space=vmem, size = 0x1000, scoped, tag = 'scratch operand']
  %s0 = inlined_call_operand.hbm [shape: f32[16,128], index: 0, kind: input, shape index: {}]
  %s1 = inlined_call_operand.hbm [shape: f32[16,128], index: 1, kind: input, shape index: {}]
  %s2 = inlined_call_operand.hbm [shape: f32[16,128], index: 2, kind: output, shape index: {}]
  %s3 = sld [smem:[#allocation0]]
  $region65: #{tpu_custom_call.1} parent=0
    _
  %s5 = ssub.s32 1, %s3
  %s6 = scalar_select 0, %s5, %s3
  $region1: #{tpu_custom_call.1} parent=0
    #allocation3 [shape = 'u8[16384]{0}', space=vmem, size = 0x4000, scoped, tag = 'input window, operand 0']
    #allocation4 [shape = 's32[2]{0}', space=sflag, size = 0x8, scoped, tag = 'scoped memory for tpu_custom_call.1']
    #allocation5 [shape = 's32[2]{0}', space=sflag, size = 0x8, scoped, tag = 'scoped memory for tpu_custom_call.1']
    #allocation6 [shape = 'u8[16384]{0}', space=vmem, size = 0x4000, scoped, tag = 'input window, operand 1']
    #allocation7 [shape = 's32[2]{0}', space=sflag, size = 0x8, scoped, tag = 'scoped memory for tpu_custom_call.1']
    #allocation8 [shape = 'u8[8192]{0}', space=vmem, size = 0x2000, scoped, tag = 'output window, operand 0']
    %7 = vsyncpa [#allocation4], 0
    %s8 = scalar_lea.sflag [#allocation4], 1
    %9 = vsyncpa %s8, 0
    %10 = vsyncpa [#allocation7], 0
    %s11 = scalar_lea.sflag [#allocation7], 1
    %12 = vsyncpa %s11, 0
    %13 = vsyncpa [#allocation5], 0
    %s14 = scalar_lea.sflag [#allocation5], 1
    %15 = vsyncpa %s14, 0
    loop: start=0, step=1, limit=4
    $region2: #{tpu_custom_call.1} parent=1 // loop_pre_header
      _
    $region3: #{tpu_custom_call.1} parent=1 // loop_header
      %s17 = sphi 0, %s21
      %p18 = scmp.ge.s32.totalorder %s17, 4
      %s24 = sphi 0, %s36
      %s25 = sphi 0, %s32
      %s26 = sphi 0, %s24
      %s27 = sphi 0, %s25
      %s28 = sphi 0, %s26
      %s29 = sphi 0, %s27
      %s45 = sphi 0, %s47
      %s48 = sphi 0, %s45
      %s49 = sphi 0, %s48
      %s65 = sphi 0, %s49
      %s77 = sphi 0, %s79
      %s80 = sphi 0, %s77
      %s81 = sphi 0, %s80
      %s97 = sphi 0, %s81
      %s103 = sphi 0, %s105
      %s106 = sphi 0, %s103
      %s107 = sphi 0, %s106
      %s123 = sphi 0, %s107
    $region4: #{tpu_custom_call.1} parent=1 // loop_header_branch
      %20 = sbr.rel (%p18) target = $region8
    $region5: #{tpu_custom_call.1} parent=1 // loop_body
      %s22 = ssub.s32 %s17, 1
      %s23 = ssub.s32 %s17, 2
      %s30 = sadd.s32 1, %s25
      %p31 = scmp.ge.s32.totalorder %s30, 1
      %s32 = scalar_select %p31, 0, %s30
      %s33 = sadd.s32 1, %s24
      %s34 = scalar_select %p31, %s33, %s24
      %p35 = scmp.ge.s32.totalorder %s34, 2
      %s36 = scalar_select %p35, 0, %s34
      %s37 = sadd.s32 %s24, %s25
      %p38 = scmp.lt.s32.totalorder %s37, 0
      %s39 = scalar_select %p38, %s37, 0
      %s40 = sadd.s32 %s36, %s32
      %p41 = scmp.lt.s32.totalorder %s40, 0
      %s42 = scalar_select %p41, %s40, 0
      %s43 = ssub.s32 %s39, %s42
      %p44 = scmp.eq.s32.totalorder %s43, 0
      %s46 = sadd.s32 %s45, 1
      %s47 = scalar_select %p44, %s45, %s46
      %p50 = pneg %p44
      %p51 = scmp.eq.s32.totalorder %s17, 1
      %p52 = por %p50, %p51
      %p53 = scmp.ne.s32.totalorder %s45, %s48
      %p54 = scmp.eq.s32.totalorder %s17, 0
      %p55 = por %p53, %p54
      %p56 = scmp.ne.s32.totalorder %s45, %s48
      %p57 = scmp.eq.s32.totalorder %s22, 1
      %p58 = por %p56, %p57
      %p59 = scmp.ne.s32.totalorder %s48, %s49
      %p60 = scmp.eq.s32.totalorder %s22, 0
      %p61 = por %p59, %p60
      %p62 = scmp.ne.s32.totalorder %s48, %s49
      %p63 = scmp.eq.s32.totalorder %s23, 1
      %p64 = por %p62, %p63
      %p66 = scmp.ne.s32.totalorder %s49, %s65
      %p67 = scmp.eq.s32.totalorder %s23, 0
      %p68 = por %p66, %p67
      %s69 = sadd.s32 %s24, %s25
      %p70 = scmp.lt.s32.totalorder %s69, 0
      %s71 = scalar_select %p70, %s69, 0
      %s72 = sadd.s32 %s36, %s32
      %p73 = scmp.lt.s32.totalorder %s72, 0
      %s74 = scalar_select %p73, %s72, 0
      %s75 = ssub.s32 %s71, %s74
      %p76 = scmp.eq.s32.totalorder %s75, 0
      %s78 = sadd.s32 %s77, 1
      %s79 = scalar_select %p76, %s77, %s78
      %p82 = pneg %p76
      %p83 = scmp.eq.s32.totalorder %s17, 1
      %p84 = por %p82, %p83
      %p85 = scmp.ne.s32.totalorder %s77, %s80
      %p86 = scmp.eq.s32.totalorder %s17, 0
      %p87 = por %p85, %p86
      %p88 = scmp.ne.s32.totalorder %s77, %s80
      %p89 = scmp.eq.s32.totalorder %s22, 1
      %p90 = por %p88, %p89
      %p91 = scmp.ne.s32.totalorder %s80, %s81
      %p92 = scmp.eq.s32.totalorder %s22, 0
      %p93 = por %p91, %p92
      %p94 = scmp.ne.s32.totalorder %s80, %s81
      %p95 = scmp.eq.s32.totalorder %s23, 1
      %p96 = por %p94, %p95
      %p98 = scmp.ne.s32.totalorder %s81, %s97
      %p99 = scmp.eq.s32.totalorder %s23, 0
      %p100 = por %p98, %p99
      %s101 = ssub.s32 %s24, %s36
      %p102 = scmp.eq.s32.totalorder %s101, 0
      %s104 = sadd.s32 %s103, 1
      %s105 = scalar_select %p102, %s103, %s104
      %p108 = pneg %p102
      %p109 = scmp.eq.s32.totalorder %s17, 1
      %p110 = por %p108, %p109
      %p111 = scmp.ne.s32.totalorder %s103, %s106
      %p112 = scmp.eq.s32.totalorder %s17, 0
      %p113 = por %p111, %p112
      %p114 = scmp.ne.s32.totalorder %s103, %s106
      %p115 = scmp.eq.s32.totalorder %s22, 1
      %p116 = por %p114, %p115
      %p117 = scmp.ne.s32.totalorder %s106, %s107
      %p118 = scmp.eq.s32.totalorder %s22, 0
      %p119 = por %p117, %p118
      %p120 = scmp.ne.s32.totalorder %s106, %s107
      %p121 = scmp.eq.s32.totalorder %s23, 1
      %p122 = por %p120, %p121
      %p124 = scmp.ne.s32.totalorder %s107, %s123
      %p125 = scmp.eq.s32.totalorder %s23, 0
      %p126 = por %p124, %p125
      %p127 = scmp.le.s32.totalorder 1, %s17
      %p128 = scmp.lt.s32.totalorder %s17, 3
      %p129 = pnand %p127, %p128
      %p130 = pneg %p129
      // Predicated region
      $region9: #{tpu_custom_call.1} parent=5 // pred_check
        _
      $region10: #{tpu_custom_call.1} parent=5 // pred_check_branch
        %132 = sbr.rel (%p129) target = $region12
      $region11: #{tpu_custom_call.1} parent=5 // pred_region
        %s133 = ssub.s32 %s17, 1
      $region12: #{tpu_custom_call.1} parent=5 // pred_fallthru
        _
      %p134 = scmp.lt.s32.totalorder %s17, 2
      // Predicated region
      $region13: #{tpu_custom_call.1} parent=5 // pred_check
        %p135 = pneg %p134
      $region14: #{tpu_custom_call.1} parent=5 // pred_check_branch
        %137 = sbr.rel (%p135) target = $region16
      $region15: #{tpu_custom_call.1} parent=5 // pred_region
        // Predicated region
        $region17: #{tpu_custom_call.1} parent=15 // pred_check
          %p138 = pneg %p55
        $region18: #{tpu_custom_call.1} parent=15 // pred_check_branch
          %140 = sbr.rel (%p138) target = $region20
        $region19: #{tpu_custom_call.1} parent=15 // pred_region
          %s141 = sand.u32 %s45, 1
          %s142 = scalar_lea.sflag [#allocation4], %s141
          %s143 = sand.u32 %s45, 1
          %s144 = smul.addr %s143, 16
          %s145 = scalar_lea.vmem [#allocation3], %s144
          %s146 = sadd.s32 %s24, %s25
          %p147 = scmp.lt.s32.totalorder %s146, 0
          %s148 = scalar_select %p147, %s146, 0
          %s149 = smul.u32 2, %s148
          %s151 = ssub.s32 256, 256
          %152 = vsyncadd %s142, %s151
          %s153 = smul.addr %s149, 128
          %s154 = scalar_lea.hbm %s0, %s153
          %s155 = sshll.u32 %s145, 4
          %s156 = int_to_ptr.vmem [resolvable:$true] %s155
          %161 = dma.hbm_to_vmem [thread:$0]  %s154, 256, %s156, %s142, 128, 128, 8
        $region20: #{tpu_custom_call.1} parent=15 // pred_fallthru
          _
        // Predicated region
        $region21: #{tpu_custom_call.1} parent=15 // pred_check
          %p162 = pneg %p87
        $region22: #{tpu_custom_call.1} parent=15 // pred_check_branch
          %164 = sbr.rel (%p162) target = $region24
        $region23: #{tpu_custom_call.1} parent=15 // pred_region
          %s165 = sand.u32 %s77, 1
          %s166 = scalar_lea.sflag [#allocation7], %s165
          %s167 = sand.u32 %s77, 1
          %s168 = smul.addr %s167, 16
          %s169 = scalar_lea.vmem [#allocation6], %s168
          %s170 = sadd.s32 %s24, %s25
          %p171 = scmp.lt.s32.totalorder %s170, 0
          %s172 = scalar_select %p171, %s170, 0
          %s173 = smul.u32 2, %s172
          %s175 = ssub.s32 256, 256
          %176 = vsyncadd %s166, %s175
          %s177 = smul.addr %s173, 128
          %s178 = scalar_lea.hbm %s1, %s177
          %s179 = sshll.u32 %s169, 4
          %s180 = int_to_ptr.vmem [resolvable:$true] %s179
          %185 = dma.hbm_to_vmem [thread:$0]  %s178, 256, %s180, %s166, 128, 128, 8
        $region24: #{tpu_custom_call.1} parent=15 // pred_fallthru
          _
      $region16: #{tpu_custom_call.1} parent=5 // pred_fallthru
        _
      %p186 = scmp.le.s32.totalorder 1, %s17
      %p187 = scmp.lt.s32.totalorder %s17, 3
      %p188 = pnand %p186, %p187
      %p189 = pneg %p188
      // Predicated region
      $region25: #{tpu_custom_call.1} parent=5 // pred_check
        _
      $region26: #{tpu_custom_call.1} parent=5 // pred_check_branch
        %191 = sbr.rel (%p188) target = $region28
      $region27: #{tpu_custom_call.1} parent=5 // pred_region
        %s192 = ssub.s32 %s17, 1
        %s193 = sand.u32 %s48, 1
        %s194 = scalar_lea.sflag [#allocation4], %s193
        %s195 = sand.u32 %s48, 1
        %s196 = smul.addr %s195, 16
        %s197 = scalar_lea.vmem [#allocation3], %s196
        // Predicated region
        $region29: #{tpu_custom_call.1} parent=27 // pred_check
          %p198 = pneg %p61
        $region30: #{tpu_custom_call.1} parent=27 // pred_check_branch
          %200 = sbr.rel (%p198) target = $region32
        $region31: #{tpu_custom_call.1} parent=27 // pred_region
          %201 = dma.done %s194, 256
        $region32: #{tpu_custom_call.1} parent=27 // pred_fallthru
          _
        %s202 = sand.u32 %s80, 1
        %s203 = scalar_lea.sflag [#allocation7], %s202
        %s204 = sand.u32 %s80, 1
        %s205 = smul.addr %s204, 16
        %s206 = scalar_lea.vmem [#allocation6], %s205
        // Predicated region
        $region33: #{tpu_custom_call.1} parent=27 // pred_check
          %p207 = pneg %p93
        $region34: #{tpu_custom_call.1} parent=27 // pred_check_branch
          %209 = sbr.rel (%p207) target = $region36
        $region35: #{tpu_custom_call.1} parent=27 // pred_region
          %210 = dma.done %s203, 256
        $region36: #{tpu_custom_call.1} parent=27 // pred_fallthru
          _
        %s211 = sand.u32 %s48, 1
        %s212 = scalar_lea.sflag [#allocation4], %s211
        %s213 = sand.u32 %s48, 1
        %s214 = smul.addr %s213, 16
        %s215 = scalar_lea.vmem [#allocation3], %s214
        %p216 = pneg %p61
        %p217 = pneg %p58
        %s218 = sand.u32 %s80, 1
        %s219 = scalar_lea.sflag [#allocation7], %s218
        %s220 = sand.u32 %s80, 1
        %s221 = smul.addr %s220, 16
        %s222 = scalar_lea.vmem [#allocation6], %s221
        %p223 = pneg %p93
        %p224 = pneg %p90
        %p225 = pneg %p119
        %p226 = pneg %p116
        %s227 = sand.u32 %s106, 1
        %s228 = scalar_lea.sflag [#allocation5], %s227
        %s229 = sand.u32 %s106, 1
        %s230 = smul.addr %s229, 8
        %s231 = scalar_lea.vmem [#allocation8], %s230
        %s232 = sadd.s32 %s26, %s27
        %p233 = scmp.lt.s32.totalorder %s232, 0
        %s234 = scalar_select %p233, %s232, 0
        %s235 = smul.u32 2, %s234
        %s236 = sadd.s32 %s26, %s27
        %p237 = scmp.lt.s32.totalorder %s236, 0
        %s238 = scalar_select %p237, %s236, 0
        %s239 = smul.u32 2, %s238
        %p240 = scmp.eq.s32.totalorder %s27, 0
        // Predicated region
        $region37: #{tpu_custom_call.1} parent=27 // pred_check
          %p241 = pneg %p240
        $region38: #{tpu_custom_call.1} parent=27 // pred_check_branch
          %243 = sbr.rel (%p241) target = $region40
        $region39: #{tpu_custom_call.1} parent=27 // pred_region
          %244 = vst [vmem:[#allocation2] sm:$0xff] 0.0
        $region40: #{tpu_custom_call.1} parent=27 // pred_fallthru
          _
        %s245 = sadd.s32 %s26, %s27
        %p246 = scmp.lt.s32.totalorder %s245, 1
        // Predicated region
        $region41: #{tpu_custom_call.1} parent=27 // pred_check
          %p247 = pneg %p246
        $region42: #{tpu_custom_call.1} parent=27 // pred_check_branch
          %249 = sbr.rel (%p247) target = $region44
        $region43: #{tpu_custom_call.1} parent=27 // pred_region
          %v250 = vld [vmem:[%s197] sm:$0xff]
          %v251 = vld [vmem:[%s197 + $0x8] sm:$0xff]
          %v252 = vld [vmem:[%s206] sm:$0xff]
          %v253 = vld [vmem:[%s206 + $0x8] sm:$0xff]
          %v254 = vlog2.pop %v250
          %v255 = vmul.f32 %v254, 0.6931472
          %v256 = vlog2.pop %v251
          %v257 = vmul.f32 %v256, 0.6931472
          %v258 = vmax.f32 %v255, -100.0
          %v259 = vmax.f32 %v257, -100.0
          %v260 = vsub.f32 1.0, %v250
          %v261 = vsub.f32 1.0, %v251
          %v262 = vlog2.pop %v260
          %v263 = vmul.f32 %v262, 0.6931472
          %v264 = vlog2.pop %v261
          %v265 = vmul.f32 %v264, 0.6931472
          %v266 = vmax.f32 %v263, -100.0
          %v267 = vmax.f32 %v265, -100.0
          %v268 = vmul.f32 %v252, %v258
          %v269 = vmul.f32 %v253, %v259
          %v270 = vsub.f32 1.0, %v252
          %v271 = vsub.f32 1.0, %v253
          %v272 = vmul.f32 %v270, %v266
          %v273 = vmul.f32 %v271, %v267
          %v274 = vadd.f32 %v268, %v272
          %v275 = vadd.f32 %v269, %v273
          %v276 = vsub.f32 0.0, %v274
          %v277 = vsub.f32 0.0, %v275
          %v278 = vld [vmem:[#allocation2] sm:$0xff]
          %v279 = vadd.f32 %v276, %v277
          %v280 = vadd.f32 %v278, %v279
          %281 = vst [vmem:[#allocation2] sm:$0xff] %v280
        $region44: #{tpu_custom_call.1} parent=27 // pred_fallthru
          _
        %p282 = scmp.ge.s32.totalorder %s245, 1
        // Predicated region
        $region45: #{tpu_custom_call.1} parent=27 // pred_check
          %p283 = pneg %p282
        $region46: #{tpu_custom_call.1} parent=27 // pred_check_branch
          %285 = sbr.rel (%p283) target = $region48
        $region47: #{tpu_custom_call.1} parent=27 // pred_region
          %v286 = vlaneseq
          %v287 = vshrl.u32 %v286, 7
          %v288 = vadd.s32 %v287, 8
          %s289 = smul.u32 %s245, 16
          %v290 = vstv %s289
          %v291 = vadd.s32 %v290, %v287
          %v292 = vadd.s32 %v290, %v288
          %vm293 = vcmp.lt.s32.totalorder %v291, 16
          %vm294 = vcmp.lt.s32.totalorder %v292, 16
          %v295 = vld [vmem:[%s197] sm:$0xff]
          %v296 = vld [vmem:[%s197 + $0x8] sm:$0xff]
          %v297 = vsel %vm293, %v295, 1.0
          %v298 = vsel %vm294, %v296, 1.0
          %v299 = vld [vmem:[%s206] sm:$0xff]
          %v300 = vld [vmem:[%s206 + $0x8] sm:$0xff]
          %v301 = vsel %vm293, %v299, 1.0
          %v302 = vsel %vm294, %v300, 1.0
          %v303 = vlog2.pop %v297
          %v304 = vmul.f32 %v303, 0.6931472
          %v305 = vlog2.pop %v298
          %v306 = vmul.f32 %v305, 0.6931472
          %v307 = vmax.f32 %v304, -100.0
          %v308 = vmax.f32 %v306, -100.0
          %v309 = vsub.f32 1.0, %v297
          %v310 = vsub.f32 1.0, %v298
          %v311 = vlog2.pop %v309
          %v312 = vmul.f32 %v311, 0.6931472
          %v313 = vlog2.pop %v310
          %v314 = vmul.f32 %v313, 0.6931472
          %v315 = vmax.f32 %v312, -100.0
          %v316 = vmax.f32 %v314, -100.0
          %v317 = vmul.f32 %v301, %v307
          %v318 = vmul.f32 %v302, %v308
          %v319 = vsub.f32 1.0, %v301
          %v320 = vsub.f32 1.0, %v302
          %v321 = vmul.f32 %v319, %v315
          %v322 = vmul.f32 %v320, %v316
          %v323 = vadd.f32 %v317, %v321
          %v324 = vadd.f32 %v318, %v322
          %v325 = vsub.f32 0.0, %v323
          %v326 = vsub.f32 0.0, %v324
          %v327 = vld [vmem:[#allocation2] sm:$0xff]
          %v328 = vadd.f32 %v325, %v326
          %v329 = vadd.f32 %v327, %v328
          %330 = vst [vmem:[#allocation2] sm:$0xff] %v329
        $region48: #{tpu_custom_call.1} parent=27 // pred_fallthru
          _
        // Predicated region
        $region49: #{tpu_custom_call.1} parent=27 // pred_check
          %p331 = pneg %p240
        $region50: #{tpu_custom_call.1} parent=27 // pred_check_branch
          %333 = sbr.rel (%p331) target = $region52
        $region51: #{tpu_custom_call.1} parent=27 // pred_region
          %v334 = vld [vmem:[#allocation2] sm:$0xff]
          %335 = vst [vmem:[%s231] sm:$0xff] %v334
        $region52: #{tpu_custom_call.1} parent=27 // pred_fallthru
          _
        %s336 = sand.u32 %s106, 1
        %s337 = scalar_lea.sflag [#allocation5], %s336
        %s338 = sand.u32 %s106, 1
        %s339 = smul.addr %s338, 8
        %s340 = scalar_lea.vmem [#allocation8], %s339
        // Predicated region
        $region53: #{tpu_custom_call.1} parent=27 // pred_check
          %p341 = pneg %p116
        $region54: #{tpu_custom_call.1} parent=27 // pred_check_branch
          %343 = sbr.rel (%p341) target = $region56
        $region55: #{tpu_custom_call.1} parent=27 // pred_region
          %s345 = ssub.s32 128, 128
          %346 = vsyncadd %s337, %s345
          %s347 = smul.addr %s26, 128
          %s348 = scalar_lea.hbm %s2, %s347
          %s350 = sshll.u32 %s340, 4
          %s351 = int_to_ptr.vmem [resolvable:$true] %s350
          %353 = dma.vmem_to_hbm [thread:$0]  %s351, 128, %s348, %s337
        $region56: #{tpu_custom_call.1} parent=27 // pred_fallthru
          _
      $region28: #{tpu_custom_call.1} parent=5 // pred_fallthru
        _
      %p354 = scmp.le.s32.totalorder 2, %s17
      // Predicated region
      $region57: #{tpu_custom_call.1} parent=5 // pred_check
        %p355 = pneg %p354
      $region58: #{tpu_custom_call.1} parent=5 // pred_check_branch
        %357 = sbr.rel (%p355) target = $region60
      $region59: #{tpu_custom_call.1} parent=5 // pred_region
        %s358 = ssub.s32 %s17, 2
        // Predicated region
        $region61: #{tpu_custom_call.1} parent=59 // pred_check
          %p359 = pneg %p122
        $region62: #{tpu_custom_call.1} parent=59 // pred_check_branch
          %361 = sbr.rel (%p359) target = $region64
        $region63: #{tpu_custom_call.1} parent=59 // pred_region
          %s362 = sand.u32 %s107, 1
          %s363 = scalar_lea.sflag [#allocation5], %s362
          %s364 = sand.u32 %s107, 1
          %s365 = smul.addr %s364, 8
          %s366 = scalar_lea.vmem [#allocation8], %s365
          %367 = dma.done %s363, 128
        $region64: #{tpu_custom_call.1} parent=59 // pred_fallthru
          _
      $region60: #{tpu_custom_call.1} parent=5 // pred_fallthru
        _
    $region6: #{tpu_custom_call.1} parent=1 // loop_footer
      %s21 = sadd.s32 1, %s17
    $region7: #{tpu_custom_call.1} parent=1 // loop_footer_branch
      %16 = sbr.rel target = $region3
    $region8: #{tpu_custom_call.1} parent=1 // loop_exit
      _
    %368 = vsyncpa [#allocation4], 1
    %s369 = scalar_lea.sflag [#allocation4], 1
    %370 = vsyncpa %s369, 1
    %371 = vsyncpa [#allocation7], 1
    %s372 = scalar_lea.sflag [#allocation7], 1
    %373 = vsyncpa %s372, 1
    %374 = vsyncpa [#allocation5], 1
    %s375 = scalar_lea.sflag [#allocation5], 1
    %376 = vsyncpa %s375, 1

</llo_original>
